<compile_context>
chip_gen: v7x
topology: tpu7x:2x2x1
jax: 0.10.0
libtpu: 0.0.40
codegen_flags: <defaults>
</compile_context>

<pallas_src>
import functools

import jax
import jax.numpy as jnp
from jax import lax
from jax.experimental import pallas as pl
from jax.experimental.pallas import tpu as pltpu

EPS = 1e-5


def _round_up(a, m):
    return (a + m - 1) // m * m


def prenorm_kernel(x_ref, w_ref, b_ref, o_ref):
    # x_ref: (tm, D) row tile.  w_ref: (D, D) bf16 folded weight (gamma
    # pre-multiplied).  b_ref: (1, D) f32 folded bias.
    x = x_ref[...].astype(jnp.float32)

    # --- LayerNorm statistics over the last dim (f32, two-pass for safety) ---
    mean = jnp.mean(x, axis=-1, keepdims=True)
    centered = x - mean
    var = jnp.mean(centered * centered, axis=-1, keepdims=True)
    xn = centered * lax.rsqrt(var + EPS)           # gamma/beta folded into W'/b'

    # --- fn = Linear: y = xn @ W' + b'  (bf16 MXU inputs, f32 accumulation) ---
    y = jnp.dot(xn.astype(jnp.bfloat16), w_ref[...],
                preferred_element_type=jnp.float32)
    y = y + b_ref[...]

    # --- residual: re-read x_ref here to keep the f32 tile's live range short ---
    o_ref[...] = (y + x_ref[...].astype(jnp.float32)).astype(o_ref.dtype)


@functools.partial(jax.jit, static_argnames=("tm",))
def prenorm(x, gamma, beta, w_t, b, *, tm=512):
    """x: (B, N, D). gamma/beta: (D,). w_t: (D, D) = W^T. b: (D,)."""
    B, N, D = x.shape
    rows = B * N

    # Clamp the tile to the (8-aligned) row count for small inputs, and pad
    # rows up to a tile multiple for arbitrary shapes (padded rows are
    # computed independently per-row and discarded afterwards).
    tm = min(tm, _round_up(rows, 8))
    rows_p = _round_up(rows, tm)

    x2 = x.reshape(rows, D)
    if rows_p != rows:
        x2 = jnp.pad(x2, ((0, rows_p - rows), (0, 0)))

    # Fold gamma/beta/bias into the weight (algebraically identical since the
    # residual uses x, not the normalized xn):
    #   (xn*gamma + beta) @ W^T + b = xn @ (gamma[:,None]*W^T) + (beta @ W^T + b)
    w_f32 = w_t.astype(jnp.float32)
    w_fold = (gamma.astype(jnp.float32)[:, None] * w_f32).astype(jnp.bfloat16)
    b_fold = (beta.astype(jnp.float32) @ w_f32 + b.astype(jnp.float32)).reshape(1, D)

    grid = (rows_p // tm,)
    cost = pl.CostEstimate(
        flops=2 * rows_p * D * D,
        transcendentals=rows_p,
        bytes_accessed=(2 * rows_p * D * x.dtype.itemsize   # x in + out
                        + D * D * 2                          # bf16 weight
                        + D * 4),                            # bias
    )

    out = pl.pallas_call(
        prenorm_kernel,
        out_shape=jax.ShapeDtypeStruct((rows_p, D), x.dtype),
        grid_spec=pltpu.PrefetchScalarGridSpec(
            num_scalar_prefetch=0,
            grid=grid,
            in_specs=[
                pl.BlockSpec((tm, D), lambda i: (i, 0)),   # x rows
                pl.BlockSpec((D, D), lambda i: (0, 0)),    # folded W (bf16)
                pl.BlockSpec((1, D), lambda i: (0, 0)),    # folded bias (f32)
            ],
            out_specs=pl.BlockSpec((tm, D), lambda i: (i, 0)),
        ),
        compiler_params=pltpu.CompilerParams(
            dimension_semantics=("parallel",),
            vmem_limit_bytes=48 << 20,   # safe on v5e/v6e (128 MiB) and v7x (64 MiB)
        ),
        cost_estimate=cost,
    )(x2, w_fold, b_fold)

    return out[:rows].reshape(B, N, D)


def prenorm_ref(x, gamma, beta, w_t, b):
    xf = x.astype(jnp.float32)
    mean = jnp.mean(xf, axis=-1, keepdims=True)
    var = jnp.mean((xf - mean) ** 2, axis=-1, keepdims=True)
    xn = (xf - mean) * lax.rsqrt(var + EPS) * gamma + beta
    y = xn @ w_t.astype(jnp.float32) + b
    return (y + xf).astype(x.dtype)


if __name__ == "__main__":
    B, N, D = 2, 8, 128  # batch, seq, hidden (LayerNorm dim)

    key = jax.random.PRNGKey(0)
    kx, kw, kb = jax.random.split(key, 3)

    x = jax.random.normal(kx, (B, N, D), dtype=jnp.float32)

    # nn.LayerNorm(dim) init: weight = ones, bias = zeros
    gamma = jnp.ones((D,), jnp.float32)
    beta = jnp.zeros((D,), jnp.float32)

    # fn = Linear(dim, dim); deterministic synthetic init
    w = jax.random.normal(kw, (D, D), dtype=jnp.float32) * (1.0 / jnp.sqrt(D))
    b = jax.random.normal(kb, (D,), dtype=jnp.float32) * 0.01
    w_t = w.T  # kernel consumes xn @ W^T

    out = prenorm(x, gamma, beta, w_t, b)
    out = jax.block_until_ready(out)

    ref = prenorm_ref(x, gamma, beta, w_t, b)
    assert out.shape == (B, N, D)
    # bf16 matmul operands (f32 accumulation) vs. the pure-f32 reference:
    # expected max abs error ~4e-3 at D=128, so use a 2e-2 tolerance.
    assert jnp.max(jnp.abs(out - ref)) < 2e-2, "mismatch vs reference"

    print("KERNEL_OK")
</pallas_src>

<mosaic_0001>
module attributes {stable_mosaic.version = 11 : i64} {
  func.func @prenorm_kernel(%arg0: i32, %arg1: memref<16x128xf32, #tpu.memory_space<vmem>>, %arg2: memref<128x128xbf16, #tpu.memory_space<vmem>>, %arg3: memref<1x128xf32, #tpu.memory_space<vmem>>, %arg4: memref<16x128xf32, #tpu.memory_space<vmem>>) attributes {dimension_semantics = [#tpu.dimension_semantics<parallel>], iteration_bounds = array<i64: 1>, scalar_prefetch = 0 : i64, scratch_operands = 0 : i64, tpu.core_type = #tpu.core_type<tc>, window_params = [{transform_indices = @transform_0, window_bounds = array<i64: 16, 128>}, {pipeline_mode = #tpu.pipeline_mode<synchronous>, transform_indices = @transform_1, window_bounds = array<i64: 128, 128>}, {pipeline_mode = #tpu.pipeline_mode<synchronous>, transform_indices = @transform_2, window_bounds = array<i64: 1, 128>}, {transform_indices = @transform_3, window_bounds = array<i64: 16, 128>}]} {
    %c0 = arith.constant 0 : index
    %c0_0 = arith.constant 0 : index
    %0 = vector.load %arg1[%c0, %c0_0] : memref<16x128xf32, #tpu.memory_space<vmem>>, vector<16x128xf32>
    %cst = arith.constant dense<0.000000e+00> : vector<16xf32>
    %1 = vector.multi_reduction <add>, %0, %cst [1] : vector<16x128xf32> to vector<16xf32>
    %2 = vector.shape_cast %1 : vector<16xf32> to vector<16x1xf32>
    %cst_1 = arith.constant 1.280000e+02 : f32
    %3 = vector.broadcast %cst_1 : f32 to vector<16x1xf32>
    %4 = arith.divf %2, %3 : vector<16x1xf32>
    %5 = vector.broadcast %4 : vector<16x1xf32> to vector<16x128xf32>
    %6 = arith.subf %0, %5 : vector<16x128xf32>
    %7 = arith.mulf %6, %6 : vector<16x128xf32>
    %cst_2 = arith.constant dense<0.000000e+00> : vector<16xf32>
    %8 = vector.multi_reduction <add>, %7, %cst_2 [1] : vector<16x128xf32> to vector<16xf32>
    %9 = vector.shape_cast %8 : vector<16xf32> to vector<16x1xf32>
    %cst_3 = arith.constant 1.280000e+02 : f32
    %10 = vector.broadcast %cst_3 : f32 to vector<16x1xf32>
    %11 = arith.divf %9, %10 : vector<16x1xf32>
    %cst_4 = arith.constant 9.99999974E-6 : f32
    %12 = vector.broadcast %cst_4 : f32 to vector<16x1xf32>
    %13 = arith.addf %11, %12 : vector<16x1xf32>
    %14 = math.rsqrt %13 : vector<16x1xf32>
    %15 = vector.broadcast %14 : vector<16x1xf32> to vector<16x128xf32>
    %16 = arith.mulf %6, %15 : vector<16x128xf32>
    %17 = arith.truncf %16 : vector<16x128xf32> to vector<16x128xbf16>
    %c0_5 = arith.constant 0 : index
    %c0_6 = arith.constant 0 : index
    %18 = vector.load %arg2[%c0_5, %c0_6] : memref<128x128xbf16, #tpu.memory_space<vmem>>, vector<128x128xbf16>
    %cst_7 = arith.constant dense<0.000000e+00> : vector<16x128xf32>
    %19 = tpu.matmul %17, %18, %cst_7 {dimension_numbers = #tpu.dot_dimension_numbers<[1], [0], [0], [1], [0, 0, 1, 1], [], []>} : vector<16x128xbf16>, vector<128x128xbf16>, vector<16x128xf32> -> vector<16x128xf32>
    %c0_8 = arith.constant 0 : index
    %c0_9 = arith.constant 0 : index
    %20 = vector.load %arg3[%c0_8, %c0_9] : memref<1x128xf32, #tpu.memory_space<vmem>>, vector<1x128xf32>
    %21 = vector.broadcast %20 : vector<1x128xf32> to vector<16x128xf32>
    %22 = arith.addf %19, %21 : vector<16x128xf32>
    %c0_10 = arith.constant 0 : index
    %c0_11 = arith.constant 0 : index
    %23 = vector.load %arg1[%c0_10, %c0_11] : memref<16x128xf32, #tpu.memory_space<vmem>>, vector<16x128xf32>
    %24 = arith.addf %22, %23 : vector<16x128xf32>
    %c0_12 = arith.constant 0 : index
    %c0_13 = arith.constant 0 : index
    %25 = vector.load %arg4[%c0_12, %c0_13] : memref<16x128xf32, #tpu.memory_space<vmem>>, vector<16x128xf32>
    tpu.vector_store %arg4[%c0_12, %c0_13], %24 {strides = array<i32>} : memref<16x128xf32, #tpu.memory_space<vmem>>, vector<16x128xf32>,
    return
  }
  func.func @transform_0(%arg0: i32) -> (i32, i32) {
    %c0_i32 = arith.constant 0 : i32
    %c0_i32_0 = arith.constant 0 : i32
    return %arg0, %c0_i32 : i32, i32
  }
  func.func @transform_1(%arg0: i32) -> (i32, i32) {
    %c0_i32 = arith.constant 0 : i32
    %c0_i32_0 = arith.constant 0 : i32
    %c0_i32_1 = arith.constant 0 : i32
    return %c0_i32, %c0_i32_0 : i32, i32
  }
  func.func @transform_2(%arg0: i32) -> (i32, i32) {
    %c0_i32 = arith.constant 0 : i32
    %c0_i32_0 = arith.constant 0 : i32
    %c0_i32_1 = arith.constant 0 : i32
    return %c0_i32, %c0_i32_0 : i32, i32
  }
  func.func @transform_3(%arg0: i32) -> (i32, i32) {
    %c0_i32 = arith.constant 0 : i32
    %c0_i32_0 = arith.constant 0 : i32
    return %arg0, %c0_i32 : i32, i32
  }
}

</mosaic_0001>

<llo_original>
// kernel: prenorm.1
$region0: #{prenorm.1}
  #allocation0 [shape = 'u32[]', space=smem, size = 0x4, offset = 0x4, fixed_abs, tag = 'smem constant byte address 0x4 - core index']
  #allocation1 [shape = 'u32[144,128]{1,0:T(1,128)}', space=vmem, size = 0x12000, scoped, tag = 'internal scratch']
  %s0 = inlined_call_operand.vmem [shape: f32[16,128], index: 0, kind: input, shape index: {}]
  %s1 = inlined_call_operand.vmem [shape: bf16[128,128], index: 1, kind: input, shape index: {}]
  %s2 = inlined_call_operand.vmem [shape: f32[1,128], index: 2, kind: input, shape index: {}]
  %s3 = inlined_call_operand.hbm [shape: f32[16,128], index: 3, kind: output, shape index: {}]
  %s4 = sld [smem:[#allocation0]]
  $region22: #{prenorm.1} parent=0
    _
  %s6 = ssub.s32 1, %s4
  %s7 = scalar_select 0, %s6, %s4
  $region1: #{prenorm.1} parent=0
    #allocation2 [shape = 'u8[8192]{0}', space=vmem, size = 0x2000, scoped, tag = 'output window, operand 0, single buffered']
    #allocation3 [shape = 's32[1]{0}', space=sflag, size = 0x4, scoped, tag = 'scoped memory for prenorm.1']
    %8 = vsyncpa [#allocation3], 0
    // Predicated region
    $region2: #{prenorm.1} parent=1 // pred_check
      _
    $region3: #{prenorm.1} parent=1 // pred_check_branch
      %10 = sbr.rel (0) target = $region5
    $region4: #{prenorm.1} parent=1 // pred_region
      _
    $region5: #{prenorm.1} parent=1 // pred_fallthru
      _
    // Predicated region
    $region6: #{prenorm.1} parent=1 // pred_check
      _
    $region7: #{prenorm.1} parent=1 // pred_check_branch
      %12 = sbr.rel (0) target = $region9
    $region8: #{prenorm.1} parent=1 // pred_region
      _
    $region9: #{prenorm.1} parent=1 // pred_fallthru
      _
    // Predicated region
    $region10: #{prenorm.1} parent=1 // pred_check
      _
    $region11: #{prenorm.1} parent=1 // pred_check_branch
      %14 = sbr.rel (0) target = $region13
    $region12: #{prenorm.1} parent=1 // pred_region
      _
    $region13: #{prenorm.1} parent=1 // pred_fallthru
      _
    %v16 = vld [vmem:[%s0] sm:$0xff]
    %v17 = vld [vmem:[%s0 + $0x8] sm:$0xff]
    %18 = vadd.xlane.f32.xlu0 %v16
    %v19 = vpop.xlane.xlu0 %18
    %20 = vadd.xlane.f32.xlu0 %v17
    %v21 = vpop.xlane.xlu0 %20
    %v22 = vrcp.pop 128.0
    %v23 = vmul.f32 %v19, %v22
    %v24 = vmul.f32 %v21, %v22
    %v25 = vsub.f32 %v16, %v23
    %v26 = vsub.f32 %v17, %v24
    %v27 = vmul.f32 %v25, %v25
    %v28 = vmul.f32 %v26, %v26
    %29 = vadd.xlane.f32.xlu0 %v27
    %v30 = vpop.xlane.xlu0 %29
    %31 = vadd.xlane.f32.xlu0 %v28
    %v32 = vpop.xlane.xlu0 %31
    %v33 = vmul.f32 %v30, %v22
    %v34 = vmul.f32 %v32, %v22
    %v35 = vadd.f32 %v33, 1e-05
    %v36 = vadd.f32 %v34, 1e-05
    %v37 = vrsqrt.pop %v35
    %v38 = vrsqrt.pop %v36
    %v39 = vmul.f32 %v25, %v37
    %v40 = vmul.f32 %v26, %v38
    %v41 = vpack.c.bf16 %v40, %v39
    %v42 = vld [vmem:[%s1] sm:$0xf]
    %v43 = vld [vmem:[%s1 + $0x4] sm:$0xf]
    %v44 = vld [vmem:[%s1 + $0x8] sm:$0xf]
    %v45 = vld [vmem:[%s1 + $0xc] sm:$0xf]
    %v46 = vld [vmem:[%s1 + $0x10] sm:$0xf]
    %v47 = vld [vmem:[%s1 + $0x14] sm:$0xf]
    %v48 = vld [vmem:[%s1 + $0x18] sm:$0xf]
    %v49 = vld [vmem:[%s1 + $0x1c] sm:$0xf]
    %v50 = vld [vmem:[%s1 + $0x20] sm:$0xf]
    %v51 = vld [vmem:[%s1 + $0x24] sm:$0xf]
    %v52 = vld [vmem:[%s1 + $0x28] sm:$0xf]
    %v53 = vld [vmem:[%s1 + $0x2c] sm:$0xf]
    %v54 = vld [vmem:[%s1 + $0x30] sm:$0xf]
    %v55 = vld [vmem:[%s1 + $0x34] sm:$0xf]
    %v56 = vld [vmem:[%s1 + $0x38] sm:$0xf]
    %v57 = vld [vmem:[%s1 + $0x3c] sm:$0xf]
    %v58 = vld [vmem:[%s2] sm:$0x1]
    %v60 = vlaneseq
    %v61 = vshrl.u32 %v60, 7
    %v62 = vsub.s32 0, %v61
    %v63 = vrot.slane %v58, %v62
    %v81 = vunpack.c.l.b16 %v42
    %v82 = vunpack.c.l.b16 %v43
    %v83 = vunpack.c.l.b16 %v44
    %v84 = vunpack.c.l.b16 %v45
    %v85 = vunpack.c.l.b16 %v46
    %v86 = vunpack.c.l.b16 %v47
    %v87 = vunpack.c.l.b16 %v48
    %v88 = vunpack.c.l.b16 %v49
    %v89 = vunpack.c.l.b16 %v50
    %v90 = vunpack.c.l.b16 %v51
    %v91 = vunpack.c.l.b16 %v52
    %v92 = vunpack.c.l.b16 %v53
    %v93 = vunpack.c.l.b16 %v54
    %v94 = vunpack.c.l.b16 %v55
    %v95 = vunpack.c.l.b16 %v56
    %v96 = vunpack.c.l.b16 %v57
    %v97 = vpack.c.b16 %v82, %v81
    %v98 = vpack.c.b16 %v84, %v83
    %v99 = vpack.c.b16 %v86, %v85
    %v100 = vpack.c.b16 %v88, %v87
    %v101 = vpack.c.b16 %v90, %v89
    %v102 = vpack.c.b16 %v92, %v91
    %v103 = vpack.c.b16 %v94, %v93
    %v104 = vpack.c.b16 %v96, %v95
    %113 = vmatprep.subr.bf16.mxu0 0
    %114 = vmatpush1.bf16.msra.mxu0 %v97
    %115 = vmatprep.subr.bf16.mxu0 0
    %116 = vmatpush1.bf16.msra.mxu0 %v98
    %117 = vmatprep.subr.bf16.mxu0 0
    %118 = vmatpush1.bf16.msra.mxu0 %v99
    %119 = vmatprep.subr.bf16.mxu0 0
    %120 = vmatpush1.bf16.msra.mxu0 %v100
    %121 = vmatprep.subr.bf16.mxu0 0
    %122 = vmatpush1.bf16.msra.mxu0 %v101
    %123 = vmatprep.subr.bf16.mxu0 0
    %124 = vmatpush1.bf16.msra.mxu0 %v102
    %125 = vmatprep.subr.bf16.mxu0 0
    %126 = vmatpush1.bf16.msra.mxu0 %v103
    %127 = vmatprep.subr.bf16.mxu0 0
    %128 = vmatpush1.bf16.msra.mxu0 %v104
    %129 = vmatprep.subr.bf16.mxu0 0
    %130 = vmatpush1.bf16.msra.mxu0 0
    %131 = vmatprep.subr.bf16.mxu0 0
    %132 = vmatpush1.bf16.msra.mxu0 0
    %133 = vmatprep.subr.bf16.mxu0 0
    %134 = vmatpush1.bf16.msra.mxu0 0
    %135 = vmatprep.subr.bf16.mxu0 0
    %136 = vmatpush1.bf16.msra.mxu0 0
    %137 = vmatprep.subr.bf16.mxu0 0
    %138 = vmatpush1.bf16.msra.mxu0 0
    %139 = vmatprep.subr.bf16.mxu0 0
    %140 = vmatpush1.bf16.msra.mxu0 0
    %141 = vmatprep.subr.bf16.mxu0 0
    %142 = vmatpush1.bf16.msra.mxu0 0
    %143 = vmatprep.subr.bf16.mxu0 0
    %144 = vmatpush1.bf16.msra.mxu0 0
    %145 = vmatprep.mubr.bf16.mxu0 0
    %146 = vmatmul.mubr.bf16.gmra.mrb[0].mxu0 %v41
    %v147 = vpop.f32.mrb[0].mxu0
    %v148 = vadd.f32 %v63, %v147
    %v149 = vpop.f32.mrb[0].mxu0
    %v150 = vpop.f32.mrb[0].mxu0
    %v151 = vadd.f32 %v63, %v150
    %v152 = vpop.f32.mrb[0].mxu0
    %153 = vdwg.mxu0
    %v154 = vadd.f32 %v148, %v16
    %v155 = vadd.f32 %v151, %v17
    %156 = vst [vmem:[#allocation2] sm:$0xff] %v154
    %157 = vst [vmem:[#allocation2 + $0x8] sm:$0xff] %v155
    // Predicated region
    $region14: #{prenorm.1} parent=1 // pred_check
      _
    $region15: #{prenorm.1} parent=1 // pred_check_branch
      %159 = sbr.rel (0) target = $region17
    $region16: #{prenorm.1} parent=1 // pred_region
      %s161 = ssub.s32 256, 256
      %162 = vsyncadd [#allocation3], %s161
      %s163 = sshll.u32 [#allocation2], 4
      %s164 = int_to_ptr.vmem [resolvable:$true] %s163
      %169 = dma.vmem_to_hbm [thread:$0]  %s164, 256, %s3, [#allocation3], 128, 128, 8
    $region17: #{prenorm.1} parent=1 // pred_fallthru
      _
    // Predicated region
    $region18: #{prenorm.1} parent=1 // pred_check
      _
    $region19: #{prenorm.1} parent=1 // pred_check_branch
      %171 = sbr.rel (0) target = $region21
    $region20: #{prenorm.1} parent=1 // pred_region
      %172 = dma.done [#allocation3], 256
    $region21: #{prenorm.1} parent=1 // pred_fallthru
      _
    %173 = vsyncpa [#allocation3], 1

</llo_original>
